<compile_context>
chip_gen: v5e
topology: v5e:2x2
jax: 0.10.0
libtpu: 0.0.40
codegen_flags: <defaults>
</compile_context>

<pallas_src>
import jax
import jax.numpy as jnp
from jax.experimental import pallas as pl
from jax.experimental.pallas import tpu as pltpu

# Model hyperparameters (small, consistent with the module)
BLOCK_SIZE = 8      # block_size (T)
VOCAB_SIZE = 256    # vocab_size (V)
EMB_DIM = 64        # emb_dim (E)
HIDDEN_SIZE = 128   # hidden_size (H)
BATCH = 2           # B


def nwp_kernel(x_ref, m_ref, b1_ref, w2_ref, b2_ref, out_ref, hid_ref):
    # x_ref:  (B, T)     int32 token ids   (SMEM: scalar reads drive the gather)
    # m_ref:  (T*V, H)   f32 folded emb@W1 table (VMEM)
    # b1_ref: (1, H)     f32
    # w2_ref: (H, V)     f32
    # b2_ref: (1, V)     f32
    # out_ref:(B, V)     f32 logits
    # hid_ref:(B, H)     f32 scratch (pre-activation hidden rows)
    B, T = x_ref.shape
    TV, H = m_ref.shape
    V = TV // T

    # Gather-and-sum replaces emb-lookup + lin1:
    #   hidden[b, :] = sum_t M[t*V + x[b, t], :]
    # B*T = 16 dynamic single-row vector loads + adds; no MXU, no one-hot.
    for b in range(B):
        acc = jnp.zeros((1, H), dtype=jnp.float32)
        for t in range(T):
            tok = jnp.clip(x_ref[b, t], 0, V - 1)       # scalar (SMEM) read + clamp
            key = t * V + tok                            # flat row index into M
            acc = acc + m_ref[pl.ds(key, 1), :]          # (1, H) dynamic row load
        hid_ref[pl.ds(b, 1), :] = acc

    hidden = jnp.maximum(hid_ref[...] + b1_ref[...], 0.0)          # bias + ReLU

    # lin2: (B, H) @ (H, V), f32 accumulation on the MXU.
    logits = jnp.dot(hidden, w2_ref[...],
                     preferred_element_type=jnp.float32) + b2_ref[...]
    out_ref[...] = logits.astype(out_ref.dtype)


def fold_embedding_into_lin1(emb, w1):
    """One-time weight transform: M[t*V + v, h] = sum_e emb[v, e] * W1[t*E + e, h]."""
    V, E = emb.shape
    TE, H = w1.shape
    T = TE // E
    m = jnp.einsum("ve,teh->tvh", emb, w1.reshape(T, E, H),
                   precision=jax.lax.Precision.HIGHEST)             # (T, V, H) f32
    return m.reshape(T * V, H)                                       # (T*V, H) f32


def next_word_predictor(x, m_folded, b1, w2, b2):
    B = x.shape[0]
    V = w2.shape[1]
    H = w2.shape[0]
    smem = pl.BlockSpec(memory_space=pltpu.MemorySpace.SMEM)
    vmem = pl.BlockSpec(memory_space=pltpu.MemorySpace.VMEM)
    # Single grid step: total residency ~1.2 MiB (fits any generation's VMEM).
    return pl.pallas_call(
        nwp_kernel,
        out_shape=jax.ShapeDtypeStruct((B, V), jnp.float32),
        in_specs=[smem, vmem, vmem, vmem, vmem],
        out_specs=vmem,
        scratch_shapes=[pltpu.VMEM((B, H), jnp.float32)],
    )(x.astype(jnp.int32), m_folded, b1, w2, b2)


def _reference_f32(x, emb, w1, b1, w2, b2):
    """Exact PyTorch-module semantics in f32 (ReLU activation)."""
    e = emb[x]                                   # (B, T, E)
    flat = e.reshape(e.shape[0], -1)             # (B, T*E)
    h = jnp.maximum(
        jnp.dot(flat, w1, precision=jax.lax.Precision.HIGHEST) + b1, 0.0)
    return jnp.dot(h, w2, precision=jax.lax.Precision.HIGHEST) + b2


if __name__ == "__main__":
    key = jax.random.PRNGKey(0)
    k_x, k_emb, k_w1, k_b1, k_w2, k_b2 = jax.random.split(key, 6)

    # Deterministic synthetic parameters (PyTorch-like init scales).
    x = jax.random.randint(k_x, (BATCH, BLOCK_SIZE), 0, VOCAB_SIZE, dtype=jnp.int32)
    emb = jax.random.normal(k_emb, (VOCAB_SIZE, EMB_DIM), dtype=jnp.float32)

    fan_in1 = BLOCK_SIZE * EMB_DIM
    bound1 = 1.0 / (fan_in1 ** 0.5)
    w1 = jax.random.uniform(k_w1, (fan_in1, HIDDEN_SIZE), jnp.float32, -bound1, bound1)
    b1 = jax.random.uniform(k_b1, (1, HIDDEN_SIZE), jnp.float32, -bound1, bound1)

    bound2 = 1.0 / (HIDDEN_SIZE ** 0.5)
    w2 = jax.random.uniform(k_w2, (HIDDEN_SIZE, VOCAB_SIZE), jnp.float32, -bound2, bound2)
    b2 = jax.random.uniform(k_b2, (1, VOCAB_SIZE), jnp.float32, -bound2, bound2)

    # One-time weight preprocessing (would be cached alongside the checkpoint).
    m_folded = fold_embedding_into_lin1(emb, w1)       # (T*V, H) f32

    out = next_word_predictor(x, m_folded, b1, w2, b2)
    out = jax.block_until_ready(out)
    assert out.shape == (BATCH, VOCAB_SIZE)

    # Kernel vs exact f32 module semantics (only diff: lin1 accumulation order
    # through the folded table -> a few ulps).
    ref = _reference_f32(x, emb, w1, b1, w2, b2)
    assert jnp.allclose(out, ref, atol=1e-3, rtol=1e-3), "mismatch vs f32 reference"

    print("KERNEL_OK")
</pallas_src>

<mosaic_0001>
module attributes {stable_mosaic.version = 11 : i64} {
  func.func @nwp_kernel(%arg0: memref<2x8xi32, #tpu.memory_space<smem>>, %arg1: memref<2048x128xf32, #tpu.memory_space<vmem>>, %arg2: memref<1x128xf32, #tpu.memory_space<vmem>>, %arg3: memref<128x256xf32, #tpu.memory_space<vmem>>, %arg4: memref<1x256xf32, #tpu.memory_space<vmem>>, %arg5: memref<2x256xf32, #tpu.memory_space<vmem>>, %arg6: memref<2x128xf32, #tpu.memory_space<vmem>>) attributes {dimension_semantics = [], scalar_prefetch = 0 : i64, scratch_operands = 1 : i64, tpu.core_type = #tpu.core_type<tc>} {
    %cst = arith.constant 0.000000e+00 : f32
    %0 = vector.broadcast %cst : f32 to vector<1x128xf32>
    %c0 = arith.constant 0 : index
    %c0_0 = arith.constant 0 : index
    %1 = memref.load %arg0[%c0, %c0_0] : memref<2x8xi32, #tpu.memory_space<smem>>
    %c0_i32 = arith.constant 0 : i32
    %c255_i32 = arith.constant 255 : i32
    %2 = arith.maxsi %c0_i32, %1 : i32
    %3 = arith.minsi %c255_i32, %2 : i32
    %c0_i32_1 = arith.constant 0 : i32
    %4 = arith.addi %c0_i32_1, %3 : i32
    %5 = arith.index_cast %4 : i32 to index
    %c0_2 = arith.constant 0 : index
    %6 = vector.load %arg1[%5, %c0_2] : memref<2048x128xf32, #tpu.memory_space<vmem>>, vector<1x128xf32>
    %7 = arith.addf %0, %6 : vector<1x128xf32>
    %c0_3 = arith.constant 0 : index
    %c1 = arith.constant 1 : index
    %8 = memref.load %arg0[%c0_3, %c1] : memref<2x8xi32, #tpu.memory_space<smem>>
    %c0_i32_4 = arith.constant 0 : i32
    %c255_i32_5 = arith.constant 255 : i32
    %9 = arith.maxsi %c0_i32_4, %8 : i32
    %10 = arith.minsi %c255_i32_5, %9 : i32
    %c256_i32 = arith.constant 256 : i32
    %11 = arith.addi %c256_i32, %10 : i32
    %12 = arith.index_cast %11 : i32 to index
    %c0_6 = arith.constant 0 : index
    %13 = vector.load %arg1[%12, %c0_6] : memref<2048x128xf32, #tpu.memory_space<vmem>>, vector<1x128xf32>
    %14 = arith.addf %7, %13 : vector<1x128xf32>
    %c0_7 = arith.constant 0 : index
    %c2 = arith.constant 2 : index
    %15 = memref.load %arg0[%c0_7, %c2] : memref<2x8xi32, #tpu.memory_space<smem>>
    %c0_i32_8 = arith.constant 0 : i32
    %c255_i32_9 = arith.constant 255 : i32
    %16 = arith.maxsi %c0_i32_8, %15 : i32
    %17 = arith.minsi %c255_i32_9, %16 : i32
    %c512_i32 = arith.constant 512 : i32
    %18 = arith.addi %c512_i32, %17 : i32
    %19 = arith.index_cast %18 : i32 to index
    %c0_10 = arith.constant 0 : index
    %20 = vector.load %arg1[%19, %c0_10] : memref<2048x128xf32, #tpu.memory_space<vmem>>, vector<1x128xf32>
    %21 = arith.addf %14, %20 : vector<1x128xf32>
    %c0_11 = arith.constant 0 : index
    %c3 = arith.constant 3 : index
    %22 = memref.load %arg0[%c0_11, %c3] : memref<2x8xi32, #tpu.memory_space<smem>>
    %c0_i32_12 = arith.constant 0 : i32
    %c255_i32_13 = arith.constant 255 : i32
    %23 = arith.maxsi %c0_i32_12, %22 : i32
    %24 = arith.minsi %c255_i32_13, %23 : i32
    %c768_i32 = arith.constant 768 : i32
    %25 = arith.addi %c768_i32, %24 : i32
    %26 = arith.index_cast %25 : i32 to index
    %c0_14 = arith.constant 0 : index
    %27 = vector.load %arg1[%26, %c0_14] : memref<2048x128xf32, #tpu.memory_space<vmem>>, vector<1x128xf32>
    %28 = arith.addf %21, %27 : vector<1x128xf32>
    %c0_15 = arith.constant 0 : index
    %c4 = arith.constant 4 : index
    %29 = memref.load %arg0[%c0_15, %c4] : memref<2x8xi32, #tpu.memory_space<smem>>
    %c0_i32_16 = arith.constant 0 : i32
    %c255_i32_17 = arith.constant 255 : i32
    %30 = arith.maxsi %c0_i32_16, %29 : i32
    %31 = arith.minsi %c255_i32_17, %30 : i32
    %c1024_i32 = arith.constant 1024 : i32
    %32 = arith.addi %c1024_i32, %31 : i32
    %33 = arith.index_cast %32 : i32 to index
    %c0_18 = arith.constant 0 : index
    %34 = vector.load %arg1[%33, %c0_18] : memref<2048x128xf32, #tpu.memory_space<vmem>>, vector<1x128xf32>
    %35 = arith.addf %28, %34 : vector<1x128xf32>
    %c0_19 = arith.constant 0 : index
    %c5 = arith.constant 5 : index
    %36 = memref.load %arg0[%c0_19, %c5] : memref<2x8xi32, #tpu.memory_space<smem>>
    %c0_i32_20 = arith.constant 0 : i32
    %c255_i32_21 = arith.constant 255 : i32
    %37 = arith.maxsi %c0_i32_20, %36 : i32
    %38 = arith.minsi %c255_i32_21, %37 : i32
    %c1280_i32 = arith.constant 1280 : i32
    %39 = arith.addi %c1280_i32, %38 : i32
    %40 = arith.index_cast %39 : i32 to index
    %c0_22 = arith.constant 0 : index
    %41 = vector.load %arg1[%40, %c0_22] : memref<2048x128xf32, #tpu.memory_space<vmem>>, vector<1x128xf32>
    %42 = arith.addf %35, %41 : vector<1x128xf32>
    %c0_23 = arith.constant 0 : index
    %c6 = arith.constant 6 : index
    %43 = memref.load %arg0[%c0_23, %c6] : memref<2x8xi32, #tpu.memory_space<smem>>
    %c0_i32_24 = arith.constant 0 : i32
    %c255_i32_25 = arith.constant 255 : i32
    %44 = arith.maxsi %c0_i32_24, %43 : i32
    %45 = arith.minsi %c255_i32_25, %44 : i32
    %c1536_i32 = arith.constant 1536 : i32
    %46 = arith.addi %c1536_i32, %45 : i32
    %47 = arith.index_cast %46 : i32 to index
    %c0_26 = arith.constant 0 : index
    %48 = vector.load %arg1[%47, %c0_26] : memref<2048x128xf32, #tpu.memory_space<vmem>>, vector<1x128xf32>
    %49 = arith.addf %42, %48 : vector<1x128xf32>
    %c0_27 = arith.constant 0 : index
    %c7 = arith.constant 7 : index
    %50 = memref.load %arg0[%c0_27, %c7] : memref<2x8xi32, #tpu.memory_space<smem>>
    %c0_i32_28 = arith.constant 0 : i32
    %c255_i32_29 = arith.constant 255 : i32
    %51 = arith.maxsi %c0_i32_28, %50 : i32
    %52 = arith.minsi %c255_i32_29, %51 : i32
    %c1792_i32 = arith.constant 1792 : i32
    %53 = arith.addi %c1792_i32, %52 : i32
    %54 = arith.index_cast %53 : i32 to index
    %c0_30 = arith.constant 0 : index
    %55 = vector.load %arg1[%54, %c0_30] : memref<2048x128xf32, #tpu.memory_space<vmem>>, vector<1x128xf32>
    %56 = arith.addf %49, %55 : vector<1x128xf32>
    %c0_31 = arith.constant 0 : index
    %c0_32 = arith.constant 0 : index
    %57 = vector.load %arg6[%c0_31, %c0_32] : memref<2x128xf32, #tpu.memory_space<vmem>>, vector<1x128xf32>
    tpu.vector_store %arg6[%c0_31, %c0_32], %56 {strides = array<i32>} : memref<2x128xf32, #tpu.memory_space<vmem>>, vector<1x128xf32>,
    %cst_33 = arith.constant 0.000000e+00 : f32
    %58 = vector.broadcast %cst_33 : f32 to vector<1x128xf32>
    %c1_34 = arith.constant 1 : index
    %c0_35 = arith.constant 0 : index
    %59 = memref.load %arg0[%c1_34, %c0_35] : memref<2x8xi32, #tpu.memory_space<smem>>
    %c0_i32_36 = arith.constant 0 : i32
    %c255_i32_37 = arith.constant 255 : i32
    %60 = arith.maxsi %c0_i32_36, %59 : i32
    %61 = arith.minsi %c255_i32_37, %60 : i32
    %c0_i32_38 = arith.constant 0 : i32
    %62 = arith.addi %c0_i32_38, %61 : i32
    %63 = arith.index_cast %62 : i32 to index
    %c0_39 = arith.constant 0 : index
    %64 = vector.load %arg1[%63, %c0_39] : memref<2048x128xf32, #tpu.memory_space<vmem>>, vector<1x128xf32>
    %65 = arith.addf %58, %64 : vector<1x128xf32>
    %c1_40 = arith.constant 1 : index
    %c1_41 = arith.constant 1 : index
    %66 = memref.load %arg0[%c1_40, %c1_41] : memref<2x8xi32, #tpu.memory_space<smem>>
    %c0_i32_42 = arith.constant 0 : i32
    %c255_i32_43 = arith.constant 255 : i32
    %67 = arith.maxsi %c0_i32_42, %66 : i32
    %68 = arith.minsi %c255_i32_43, %67 : i32
    %c256_i32_44 = arith.constant 256 : i32
    %69 = arith.addi %c256_i32_44, %68 : i32
    %70 = arith.index_cast %69 : i32 to index
    %c0_45 = arith.constant 0 : index
    %71 = vector.load %arg1[%70, %c0_45] : memref<2048x128xf32, #tpu.memory_space<vmem>>, vector<1x128xf32>
    %72 = arith.addf %65, %71 : vector<1x128xf32>
    %c1_46 = arith.constant 1 : index
    %c2_47 = arith.constant 2 : index
    %73 = memref.load %arg0[%c1_46, %c2_47] : memref<2x8xi32, #tpu.memory_space<smem>>
    %c0_i32_48 = arith.constant 0 : i32
    %c255_i32_49 = arith.constant 255 : i32
    %74 = arith.maxsi %c0_i32_48, %73 : i32
    %75 = arith.minsi %c255_i32_49, %74 : i32
    %c512_i32_50 = arith.constant 512 : i32
    %76 = arith.addi %c512_i32_50, %75 : i32
    %77 = arith.index_cast %76 : i32 to index
    %c0_51 = arith.constant 0 : index
    %78 = vector.load %arg1[%77, %c0_51] : memref<2048x128xf32, #tpu.memory_space<vmem>>, vector<1x128xf32>
    %79 = arith.addf %72, %78 : vector<1x128xf32>
    %c1_52 = arith.constant 1 : index
    %c3_53 = arith.constant 3 : index
    %80 = memref.load %arg0[%c1_52, %c3_53] : memref<2x8xi32, #tpu.memory_space<smem>>
    %c0_i32_54 = arith.constant 0 : i32
    %c255_i32_55 = arith.constant 255 : i32
    %81 = arith.maxsi %c0_i32_54, %80 : i32
    %82 = arith.minsi %c255_i32_55, %81 : i32
    %c768_i32_56 = arith.constant 768 : i32
    %83 = arith.addi %c768_i32_56, %82 : i32
    %84 = arith.index_cast %83 : i32 to index
    %c0_57 = arith.constant 0 : index
    %85 = vector.load %arg1[%84, %c0_57] : memref<2048x128xf32, #tpu.memory_space<vmem>>, vector<1x128xf32>
    %86 = arith.addf %79, %85 : vector<1x128xf32>
    %c1_58 = arith.constant 1 : index
    %c4_59 = arith.constant 4 : index
    %87 = memref.load %arg0[%c1_58, %c4_59] : memref<2x8xi32, #tpu.memory_space<smem>>
    %c0_i32_60 = arith.constant 0 : i32
    %c255_i32_61 = arith.constant 255 : i32
    %88 = arith.maxsi %c0_i32_60, %87 : i32
    %89 = arith.minsi %c255_i32_61, %88 : i32
    %c1024_i32_62 = arith.constant 1024 : i32
    %90 = arith.addi %c1024_i32_62, %89 : i32
    %91 = arith.index_cast %90 : i32 to index
    %c0_63 = arith.constant 0 : index
    %92 = vector.load %arg1[%91, %c0_63] : memref<2048x128xf32, #tpu.memory_space<vmem>>, vector<1x128xf32>
    %93 = arith.addf %86, %92 : vector<1x128xf32>
    %c1_64 = arith.constant 1 : index
    %c5_65 = arith.constant 5 : index
    %94 = memref.load %arg0[%c1_64, %c5_65] : memref<2x8xi32, #tpu.memory_space<smem>>
    %c0_i32_66 = arith.constant 0 : i32
    %c255_i32_67 = arith.constant 255 : i32
    %95 = arith.maxsi %c0_i32_66, %94 : i32
    %96 = arith.minsi %c255_i32_67, %95 : i32
    %c1280_i32_68 = arith.constant 1280 : i32
    %97 = arith.addi %c1280_i32_68, %96 : i32
    %98 = arith.index_cast %97 : i32 to index
    %c0_69 = arith.constant 0 : index
    %99 = vector.load %arg1[%98, %c0_69] : memref<2048x128xf32, #tpu.memory_space<vmem>>, vector<1x128xf32>
    %100 = arith.addf %93, %99 : vector<1x128xf32>
    %c1_70 = arith.constant 1 : index
    %c6_71 = arith.constant 6 : index
    %101 = memref.load %arg0[%c1_70, %c6_71] : memref<2x8xi32, #tpu.memory_space<smem>>
    %c0_i32_72 = arith.constant 0 : i32
    %c255_i32_73 = arith.constant 255 : i32
    %102 = arith.maxsi %c0_i32_72, %101 : i32
    %103 = arith.minsi %c255_i32_73, %102 : i32
    %c1536_i32_74 = arith.constant 1536 : i32
    %104 = arith.addi %c1536_i32_74, %103 : i32
    %105 = arith.index_cast %104 : i32 to index
    %c0_75 = arith.constant 0 : index
    %106 = vector.load %arg1[%105, %c0_75] : memref<2048x128xf32, #tpu.memory_space<vmem>>, vector<1x128xf32>
    %107 = arith.addf %100, %106 : vector<1x128xf32>
    %c1_76 = arith.constant 1 : index
    %c7_77 = arith.constant 7 : index
    %108 = memref.load %arg0[%c1_76, %c7_77] : memref<2x8xi32, #tpu.memory_space<smem>>
    %c0_i32_78 = arith.constant 0 : i32
    %c255_i32_79 = arith.constant 255 : i32
    %109 = arith.maxsi %c0_i32_78, %108 : i32
    %110 = arith.minsi %c255_i32_79, %109 : i32
    %c1792_i32_80 = arith.constant 1792 : i32
    %111 = arith.addi %c1792_i32_80, %110 : i32
    %112 = arith.index_cast %111 : i32 to index
    %c0_81 = arith.constant 0 : index
    %113 = vector.load %arg1[%112, %c0_81] : memref<2048x128xf32, #tpu.memory_space<vmem>>, vector<1x128xf32>
    %114 = arith.addf %107, %113 : vector<1x128xf32>
    %c1_82 = arith.constant 1 : index
    %c0_83 = arith.constant 0 : index
    %115 = vector.load %arg6[%c1_82, %c0_83] : memref<2x128xf32, #tpu.memory_space<vmem>>, vector<1x128xf32>
    tpu.vector_store %arg6[%c1_82, %c0_83], %114 {strides = array<i32>} : memref<2x128xf32, #tpu.memory_space<vmem>>, vector<1x128xf32>,
    %c0_84 = arith.constant 0 : index
    %c0_85 = arith.constant 0 : index
    %116 = vector.load %arg6[%c0_84, %c0_85] : memref<2x128xf32, #tpu.memory_space<vmem>>, vector<2x128xf32>
    %c0_86 = arith.constant 0 : index
    %c0_87 = arith.constant 0 : index
    %117 = vector.load %arg2[%c0_86, %c0_87] : memref<1x128xf32, #tpu.memory_space<vmem>>, vector<1x128xf32>
    %118 = vector.broadcast %117 : vector<1x128xf32> to vector<2x128xf32>
    %119 = arith.addf %116, %118 : vector<2x128xf32>
    %cst_88 = arith.constant 0.000000e+00 : f32
    %120 = vector.broadcast %cst_88 : f32 to vector<2x128xf32>
    %121 = arith.maximumf %119, %120 : vector<2x128xf32>
    %c0_89 = arith.constant 0 : index
    %c0_90 = arith.constant 0 : index
    %122 = vector.load %arg3[%c0_89, %c0_90] : memref<128x256xf32, #tpu.memory_space<vmem>>, vector<128x256xf32>
    %cst_91 = arith.constant dense<0.000000e+00> : vector<2x256xf32>
    %123 = tpu.matmul %121, %122, %cst_91 {dimension_numbers = #tpu.dot_dimension_numbers<[1], [0], [0], [1], [0, 0, 1, 1], [], []>} : vector<2x128xf32>, vector<128x256xf32>, vector<2x256xf32> -> vector<2x256xf32>
    %c0_92 = arith.constant 0 : index
    %c0_93 = arith.constant 0 : index
    %124 = vector.load %arg4[%c0_92, %c0_93] : memref<1x256xf32, #tpu.memory_space<vmem>>, vector<1x256xf32>
    %125 = vector.broadcast %124 : vector<1x256xf32> to vector<2x256xf32>
    %126 = arith.addf %123, %125 : vector<2x256xf32>
    %c0_94 = arith.constant 0 : index
    %c0_95 = arith.constant 0 : index
    %127 = vector.load %arg5[%c0_94, %c0_95] : memref<2x256xf32, #tpu.memory_space<vmem>>, vector<2x256xf32>
    tpu.vector_store %arg5[%c0_94, %c0_95], %126 {strides = array<i32>} : memref<2x256xf32, #tpu.memory_space<vmem>>, vector<2x256xf32>,
    return
  }
}

</mosaic_0001>

<llo_original>
// kernel: tpu_custom_call.1
$region0: #{tpu_custom_call.1}
  #allocation0 [shape = 'u32[]', space=smem, size = 0x4, offset = 0x4, fixed_abs, tag = 'smem constant byte address 0x4 - core index']
  #allocation1 [shape = 'u32[72,128]{1,0:T(1,128)}', space=vmem, size = 0x9000, scoped, tag = 'internal scratch']
  #allocation2 [shape = 'f32[2,128]{1,0:T(2,128)}', space=vmem, size = 0x400, scoped, tag = 'scratch operand']
  %s0 = inlined_call_operand.hbm [shape: s32[2,8], index: 0, kind: input, shape index: {}]
  %s1 = inlined_call_operand.hbm [shape: f32[2048,128], index: 1, kind: input, shape index: {}]
  %s2 = inlined_call_operand.vmem [shape: f32[1,128], index: 2, kind: input, shape index: {}]
  %s3 = inlined_call_operand.hbm [shape: f32[128,256], index: 3, kind: input, shape index: {}]
  %s4 = inlined_call_operand.vmem [shape: f32[1,256], index: 4, kind: input, shape index: {}]
  %s5 = inlined_call_operand.hbm [shape: f32[2,256], index: 5, kind: output, shape index: {}]
  %s6 = sld [smem:[#allocation0]]
  $region42: #{tpu_custom_call.1} parent=0
    _
  %s8 = ssub.s32 1, %s6
  %s9 = scalar_select 0, %s8, %s6
  $region1: #{tpu_custom_call.1} parent=0
    #allocation3 [shape = 'u8[1024]{0}', space=smem, size = 0x400, scoped, tag = 'input window, operand 0, single buffered']
    #allocation4 [shape = 's32[1]{0}', space=sflag, size = 0x4, scoped, tag = 'scoped memory for tpu_custom_call.1']
    #allocation5 [shape = 's32[1]{0}', space=sflag, size = 0x4, scoped, tag = 'scoped memory for tpu_custom_call.1']
    #allocation6 [shape = 's32[1]{0}', space=sflag, size = 0x4, scoped, tag = 'scoped memory for tpu_custom_call.1']
    #allocation7 [shape = 'u8[1048576]{0}', space=vmem, size = 0x100000, scoped, tag = 'input window, operand 1, single buffered']
    #allocation8 [shape = 'u8[131072]{0}', space=vmem, size = 0x20000, scoped, tag = 'input window, operand 3, single buffered']
    #allocation9 [shape = 's32[1]{0}', space=sflag, size = 0x4, scoped, tag = 'scoped memory for tpu_custom_call.1']
    #allocation10 [shape = 'u8[2048]{0}', space=vmem, size = 0x800, scoped, tag = 'output window, operand 0, single buffered']
    %10 = vsyncpa [#allocation6], 0
    %11 = vsyncpa [#allocation4], 0
    %12 = vsyncpa [#allocation9], 0
    %13 = vsyncpa [#allocation5], 0
    // Predicated region
    $region2: #{tpu_custom_call.1} parent=1 // pred_check
      _
    $region3: #{tpu_custom_call.1} parent=1 // pred_check_branch
      %15 = sbr.rel (0) target = $region5
    $region4: #{tpu_custom_call.1} parent=1 // pred_region
      %17 = vsyncadd [#allocation6], 0
      %s19 = sshll.u32 %s0, 4
      %s20 = int_to_ptr.hbm [resolvable:$true] %s19
      %22 = dma.hbm_to_smem %s20, 32, [#allocation3], [#allocation6]
    $region5: #{tpu_custom_call.1} parent=1 // pred_fallthru
      _
    // Predicated region
    $region6: #{tpu_custom_call.1} parent=1 // pred_check
      _
    $region7: #{tpu_custom_call.1} parent=1 // pred_check_branch
      %24 = sbr.rel (0) target = $region9
    $region8: #{tpu_custom_call.1} parent=1 // pred_region
      %26 = vsyncadd [#allocation4], 0
      %s27 = sshll.u32 %s1, 4
      %s28 = int_to_ptr.hbm [resolvable:$true] %s27
      %s29 = sshll.u32 [#allocation7], 4
      %s30 = int_to_ptr.vmem [resolvable:$true] %s29
      %35 = dma.hbm_to_vmem [thread:$0]  %s28, 32768, %s30, [#allocation4], 128, 128, 8
    $region9: #{tpu_custom_call.1} parent=1 // pred_fallthru
      _
    // Predicated region
    $region10: #{tpu_custom_call.1} parent=1 // pred_check
      _
    $region11: #{tpu_custom_call.1} parent=1 // pred_check_branch
      %37 = sbr.rel (0) target = $region13
    $region12: #{tpu_custom_call.1} parent=1 // pred_region
      _
    $region13: #{tpu_custom_call.1} parent=1 // pred_fallthru
      _
    // Predicated region
    $region14: #{tpu_custom_call.1} parent=1 // pred_check
      _
    $region15: #{tpu_custom_call.1} parent=1 // pred_check_branch
      %39 = sbr.rel (0) target = $region17
    $region16: #{tpu_custom_call.1} parent=1 // pred_region
      %41 = vsyncadd [#allocation9], 0
      %s42 = sshll.u32 %s3, 4
      %s43 = int_to_ptr.hbm [resolvable:$true] %s42
      %s44 = sshll.u32 [#allocation8], 4
      %s45 = int_to_ptr.vmem [resolvable:$true] %s44
      %50 = dma.hbm_to_vmem [thread:$0]  %s43, 4096, %s45, [#allocation9], 256, 256, 16
    $region17: #{tpu_custom_call.1} parent=1 // pred_fallthru
      _
    // Predicated region
    $region18: #{tpu_custom_call.1} parent=1 // pred_check
      _
    $region19: #{tpu_custom_call.1} parent=1 // pred_check_branch
      %52 = sbr.rel (0) target = $region21
    $region20: #{tpu_custom_call.1} parent=1 // pred_region
      _
    $region21: #{tpu_custom_call.1} parent=1 // pred_fallthru
      _
    // Predicated region
    $region22: #{tpu_custom_call.1} parent=1 // pred_check
      _
    $region23: #{tpu_custom_call.1} parent=1 // pred_check_branch
      %54 = sbr.rel (0) target = $region25
    $region24: #{tpu_custom_call.1} parent=1 // pred_region
      %56 = dma.done [#allocation6], 32
    $region25: #{tpu_custom_call.1} parent=1 // pred_fallthru
      _
    // Predicated region
    $region26: #{tpu_custom_call.1} parent=1 // pred_check
      _
    $region27: #{tpu_custom_call.1} parent=1 // pred_check_branch
      %58 = sbr.rel (0) target = $region29
    $region28: #{tpu_custom_call.1} parent=1 // pred_region
      %60 = dma.done [#allocation4], 32768
    $region29: #{tpu_custom_call.1} parent=1 // pred_fallthru
      _
    // Predicated region
    $region30: #{tpu_custom_call.1} parent=1 // pred_check
      _
    $region31: #{tpu_custom_call.1} parent=1 // pred_check_branch
      %62 = sbr.rel (0) target = $region33
    $region32: #{tpu_custom_call.1} parent=1 // pred_region
      %64 = dma.done [#allocation9], 4096
    $region33: #{tpu_custom_call.1} parent=1 // pred_fallthru
      _
    %65 = sfence
    %s66 = sld [smem:[#allocation3]]
    %p67 = scmp.gt.s32.totalorder %s66, 0
    %s68 = scalar_select %p67, %s66, 0
    %p69 = scmp.lt.s32.totalorder %s68, 255
    %s70 = scalar_select %p69, %s68, 255
    %s71 = scalar_lea.vmem [#allocation7], %s70
    %v72 = vld [vmem:[%s71] sm:$0x1]
    %v73 = vadd.f32 %v72, 0.0
    %s74 = sld [smem:[#allocation3 + $0x1]]
    %p75 = scmp.gt.s32.totalorder %s74, 0
    %s76 = scalar_select %p75, %s74, 0
    %p77 = scmp.lt.s32.totalorder %s76, 255
    %s78 = scalar_select %p77, %s76, 255
    %s79 = sadd.s32 %s78, 256
    %s80 = scalar_lea.vmem [#allocation7], %s79
    %v81 = vld [vmem:[%s80] sm:$0x1]
    %v82 = vadd.f32 %v73, %v81
    %s83 = sld [smem:[#allocation3 + $0x2]]
    %p84 = scmp.gt.s32.totalorder %s83, 0
    %s85 = scalar_select %p84, %s83, 0
    %p86 = scmp.lt.s32.totalorder %s85, 255
    %s87 = scalar_select %p86, %s85, 255
    %s88 = sadd.s32 %s87, 512
    %s89 = scalar_lea.vmem [#allocation7], %s88
    %v90 = vld [vmem:[%s89] sm:$0x1]
    %v91 = vadd.f32 %v82, %v90
    %s92 = sld [smem:[#allocation3 + $0x3]]
    %p93 = scmp.gt.s32.totalorder %s92, 0
    %s94 = scalar_select %p93, %s92, 0
    %p95 = scmp.lt.s32.totalorder %s94, 255
    %s96 = scalar_select %p95, %s94, 255
    %s97 = sadd.s32 %s96, 768
    %s98 = scalar_lea.vmem [#allocation7], %s97
    %v99 = vld [vmem:[%s98] sm:$0x1]
    %v100 = vadd.f32 %v91, %v99
    %s101 = sld [smem:[#allocation3 + $0x4]]
    %p102 = scmp.gt.s32.totalorder %s101, 0
    %s103 = scalar_select %p102, %s101, 0
    %p104 = scmp.lt.s32.totalorder %s103, 255
    %s105 = scalar_select %p104, %s103, 255
    %s106 = sadd.s32 %s105, 1024
    %s107 = scalar_lea.vmem [#allocation7], %s106
    %v108 = vld [vmem:[%s107] sm:$0x1]
    %v109 = vadd.f32 %v100, %v108
    %s110 = sld [smem:[#allocation3 + $0x5]]
    %p111 = scmp.gt.s32.totalorder %s110, 0
    %s112 = scalar_select %p111, %s110, 0
    %p113 = scmp.lt.s32.totalorder %s112, 255
    %s114 = scalar_select %p113, %s112, 255
    %s115 = sadd.s32 %s114, 1280
    %s116 = scalar_lea.vmem [#allocation7], %s115
    %v117 = vld [vmem:[%s116] sm:$0x1]
    %v118 = vadd.f32 %v109, %v117
    %s119 = sld [smem:[#allocation3 + $0x6]]
    %p120 = scmp.gt.s32.totalorder %s119, 0
    %s121 = scalar_select %p120, %s119, 0
    %p122 = scmp.lt.s32.totalorder %s121, 255
    %s123 = scalar_select %p122, %s121, 255
    %s124 = sadd.s32 %s123, 1536
    %s125 = scalar_lea.vmem [#allocation7], %s124
    %v126 = vld [vmem:[%s125] sm:$0x1]
    %v127 = vadd.f32 %v118, %v126
    %s128 = sld [smem:[#allocation3 + $0x7]]
    %p129 = scmp.gt.s32.totalorder %s128, 0
    %s130 = scalar_select %p129, %s128, 0
    %p131 = scmp.lt.s32.totalorder %s130, 255
    %s132 = scalar_select %p131, %s130, 255
    %s133 = sadd.s32 %s132, 1792
    %s134 = scalar_lea.vmem [#allocation7], %s133
    %v135 = vld [vmem:[%s134] sm:$0x1]
    %v136 = vadd.f32 %v127, %v135
    %137 = vst [vmem:[#allocation2] sm:$0x1] %v136
    %s138 = sld [smem:[#allocation3 + $0x80]]
    %p139 = scmp.gt.s32.totalorder %s138, 0
    %s140 = scalar_select %p139, %s138, 0
    %p141 = scmp.lt.s32.totalorder %s140, 255
    %s142 = scalar_select %p141, %s140, 255
    %s143 = scalar_lea.vmem [#allocation7], %s142
    %v144 = vld [vmem:[%s143] sm:$0x1]
    %v145 = vadd.f32 %v144, 0.0
    %s146 = sld [smem:[#allocation3 + $0x81]]
    %p147 = scmp.gt.s32.totalorder %s146, 0
    %s148 = scalar_select %p147, %s146, 0
    %p149 = scmp.lt.s32.totalorder %s148, 255
    %s150 = scalar_select %p149, %s148, 255
    %s151 = sadd.s32 %s150, 256
    %s152 = scalar_lea.vmem [#allocation7], %s151
    %v153 = vld [vmem:[%s152] sm:$0x1]
    %v154 = vadd.f32 %v145, %v153
    %s155 = sld [smem:[#allocation3 + $0x82]]
    %p156 = scmp.gt.s32.totalorder %s155, 0
    %s157 = scalar_select %p156, %s155, 0
    %p158 = scmp.lt.s32.totalorder %s157, 255
    %s159 = scalar_select %p158, %s157, 255
    %s160 = sadd.s32 %s159, 512
    %s161 = scalar_lea.vmem [#allocation7], %s160
    %v162 = vld [vmem:[%s161] sm:$0x1]
    %v163 = vadd.f32 %v154, %v162
    %s164 = sld [smem:[#allocation3 + $0x83]]
    %p165 = scmp.gt.s32.totalorder %s164, 0
    %s166 = scalar_select %p165, %s164, 0
    %p167 = scmp.lt.s32.totalorder %s166, 255
    %s168 = scalar_select %p167, %s166, 255
    %s169 = sadd.s32 %s168, 768
    %s170 = scalar_lea.vmem [#allocation7], %s169
    %v171 = vld [vmem:[%s170] sm:$0x1]
    %v172 = vadd.f32 %v163, %v171
    %s173 = sld [smem:[#allocation3 + $0x84]]
    %p174 = scmp.gt.s32.totalorder %s173, 0
    %s175 = scalar_select %p174, %s173, 0
    %p176 = scmp.lt.s32.totalorder %s175, 255
    %s177 = scalar_select %p176, %s175, 255
    %s178 = sadd.s32 %s177, 1024
    %s179 = scalar_lea.vmem [#allocation7], %s178
    %v180 = vld [vmem:[%s179] sm:$0x1]
    %v181 = vadd.f32 %v172, %v180
    %s182 = sld [smem:[#allocation3 + $0x85]]
    %p183 = scmp.gt.s32.totalorder %s182, 0
    %s184 = scalar_select %p183, %s182, 0
    %p185 = scmp.lt.s32.totalorder %s184, 255
    %s186 = scalar_select %p185, %s184, 255
    %s187 = sadd.s32 %s186, 1280
    %s188 = scalar_lea.vmem [#allocation7], %s187
    %v189 = vld [vmem:[%s188] sm:$0x1]
    %v190 = vadd.f32 %v181, %v189
    %s191 = sld [smem:[#allocation3 + $0x86]]
    %p192 = scmp.gt.s32.totalorder %s191, 0
    %s193 = scalar_select %p192, %s191, 0
    %p194 = scmp.lt.s32.totalorder %s193, 255
    %s195 = scalar_select %p194, %s193, 255
    %s196 = sadd.s32 %s195, 1536
    %s197 = scalar_lea.vmem [#allocation7], %s196
    %v198 = vld [vmem:[%s197] sm:$0x1]
    %v199 = vadd.f32 %v190, %v198
    %s200 = sld [smem:[#allocation3 + $0x87]]
    %p201 = scmp.gt.s32.totalorder %s200, 0
    %s202 = scalar_select %p201, %s200, 0
    %p203 = scmp.lt.s32.totalorder %s202, 255
    %s204 = scalar_select %p203, %s202, 255
    %s205 = sadd.s32 %s204, 1792
    %s206 = scalar_lea.vmem [#allocation7], %s205
    %v207 = vld [vmem:[%s206] sm:$0x1]
    %v208 = vadd.f32 %v199, %v207
    %209 = vst [vmem:[#allocation2 + $0x1] sm:$0x1] %v208
    %v210 = vld [vmem:[#allocation2] sm:$0x3]
    %v211 = vld [vmem:[%s2] sm:$0x1]
    %v213 = vperm.slane %v211, 0
    %v215 = vadd.f32 %v210, %v213
    %v216 = vmax.f32 %v215, 0.0
    %v217 = vld [vmem:[#allocation8] sm:$0xff]
    %v218 = vld [vmem:[#allocation8 + $0x8] sm:$0xff]
    %v219 = vld [vmem:[#allocation8 + $0x10] sm:$0xff]
    %v220 = vld [vmem:[#allocation8 + $0x18] sm:$0xff]
    %v221 = vld [vmem:[#allocation8 + $0x20] sm:$0xff]
    %v222 = vld [vmem:[#allocation8 + $0x28] sm:$0xff]
    %v223 = vld [vmem:[#allocation8 + $0x30] sm:$0xff]
    %v224 = vld [vmem:[#allocation8 + $0x38] sm:$0xff]
    %v225 = vld [vmem:[#allocation8 + $0x40] sm:$0xff]
    %v226 = vld [vmem:[#allocation8 + $0x48] sm:$0xff]
    %v227 = vld [vmem:[#allocation8 + $0x50] sm:$0xff]
    %v228 = vld [vmem:[#allocation8 + $0x58] sm:$0xff]
    %v229 = vld [vmem:[#allocation8 + $0x60] sm:$0xff]
    %v230 = vld [vmem:[#allocation8 + $0x68] sm:$0xff]
    %v231 = vld [vmem:[#allocation8 + $0x70] sm:$0xff]
    %v232 = vld [vmem:[#allocation8 + $0x78] sm:$0xff]
    %v233 = vld [vmem:[#allocation8 + $0x80] sm:$0xff]
    %v234 = vld [vmem:[#allocation8 + $0x88] sm:$0xff]
    %v235 = vld [vmem:[#allocation8 + $0x90] sm:$0xff]
    %v236 = vld [vmem:[#allocation8 + $0x98] sm:$0xff]
    %v237 = vld [vmem:[#allocation8 + $0xa0] sm:$0xff]
    %v238 = vld [vmem:[#allocation8 + $0xa8] sm:$0xff]
    %v239 = vld [vmem:[#allocation8 + $0xb0] sm:$0xff]
    %v240 = vld [vmem:[#allocation8 + $0xb8] sm:$0xff]
    %v241 = vld [vmem:[#allocation8 + $0xc0] sm:$0xff]
    %v242 = vld [vmem:[#allocation8 + $0xc8] sm:$0xff]
    %v243 = vld [vmem:[#allocation8 + $0xd0] sm:$0xff]
    %v244 = vld [vmem:[#allocation8 + $0xd8] sm:$0xff]
    %v245 = vld [vmem:[#allocation8 + $0xe0] sm:$0xff]
    %v246 = vld [vmem:[#allocation8 + $0xe8] sm:$0xff]
    %v247 = vld [vmem:[#allocation8 + $0xf0] sm:$0xff]
    %v248 = vld [vmem:[#allocation8 + $0xf8] sm:$0xff]
    %v249 = vld [vmem:[%s4] sm:$0x3]
    %v251 = vperm.slane %v249, 0
    %v252 = vperm.slane %v249, 1
    %255 = vmatpush.msra.mxu0 %v247
    %256 = vmatpush.msra.mxu0 %v245
    %257 = vmatpush.msra.mxu0 %v243
    %258 = vmatpush.msra.mxu0 %v241
    %259 = vmatpush.msra.mxu0 %v239
    %260 = vmatpush.msra.mxu0 %v237
    %261 = vmatpush.msra.mxu0 %v235
    %262 = vmatpush.msra.mxu0 %v233
    %263 = vmatpush.msra.mxu0 %v231
    %264 = vmatpush.msra.mxu0 %v229
    %265 = vmatpush.msra.mxu0 %v227
    %266 = vmatpush.msra.mxu0 %v225
    %267 = vmatpush.msra.mxu0 %v223
    %268 = vmatpush.msra.mxu0 %v221
    %269 = vmatpush.msra.mxu0 %v219
    %270 = vmatpush.msra.mxu0 %v217
    %271 = vmatmul.f32.gmra.mxu0 %v216
    %v272 = vpop.f32.mrf.mxu0
    %v273 = vadd.f32 %v251, %v272
    %274 = vdwg.mxu0
    %275 = vmatpush.msra.mxu0 %v248
    %276 = vmatpush.msra.mxu0 %v246
    %277 = vmatpush.msra.mxu0 %v244
    %278 = vmatpush.msra.mxu0 %v242
    %279 = vmatpush.msra.mxu0 %v240
    %280 = vmatpush.msra.mxu0 %v238
    %281 = vmatpush.msra.mxu0 %v236
    %282 = vmatpush.msra.mxu0 %v234
    %283 = vmatpush.msra.mxu0 %v232
    %284 = vmatpush.msra.mxu0 %v230
    %285 = vmatpush.msra.mxu0 %v228
    %286 = vmatpush.msra.mxu0 %v226
    %287 = vmatpush.msra.mxu0 %v224
    %288 = vmatpush.msra.mxu0 %v222
    %289 = vmatpush.msra.mxu0 %v220
    %290 = vmatpush.msra.mxu0 %v218
    %291 = vmatmul.f32.gmra.mxu0 %v216
    %v292 = vpop.f32.mrf.mxu0
    %v293 = vadd.f32 %v252, %v292
    %294 = vdwg.mxu0
    %v297 = vrot.slane %v293, 6
    %vm298 = vcmask 1041408
    %v299 = vsel %vm298, %v273, %v297
    %301 = vst [vmem:[#allocation10] sm:$0xf] %v299
    // Predicated region
    $region34: #{tpu_custom_call.1} parent=1 // pred_check
      _
    $region35: #{tpu_custom_call.1} parent=1 // pred_check_branch
      %303 = sbr.rel (0) target = $region37
    $region36: #{tpu_custom_call.1} parent=1 // pred_region
      %305 = vsyncadd [#allocation5], 0
      %s307 = sshll.u32 [#allocation10], 4
      %s308 = int_to_ptr.vmem [resolvable:$true] %s307
      %s309 = sshll.u32 %s5, 4
      %s310 = int_to_ptr.hbm [resolvable:$true] %s309
      %312 = dma.vmem_to_hbm [thread:$0]  %s308, 64, %s310, [#allocation5]
    $region37: #{tpu_custom_call.1} parent=1 // pred_fallthru
      _
    // Predicated region
    $region38: #{tpu_custom_call.1} parent=1 // pred_check
      _
    $region39: #{tpu_custom_call.1} parent=1 // pred_check_branch
      %314 = sbr.rel (0) target = $region41
    $region40: #{tpu_custom_call.1} parent=1 // pred_region
      %316 = dma.done [#allocation5], 64
    $region41: #{tpu_custom_call.1} parent=1 // pred_fallthru
      _
    %317 = vsyncpa [#allocation4], 1
    %318 = vsyncpa [#allocation9], 1
    %319 = vsyncpa [#allocation5], 1
    %320 = vsyncpa [#allocation6], 1

</llo_original>
